<compile_context>
chip_gen: v6e
topology: v6e:2x2x1
jax: 0.10.0
libtpu: 0.0.40
codegen_flags: <defaults>
</compile_context>

<pallas_src>
import functools
import math

import jax
import jax.numpy as jnp
from jax.experimental import pallas as pl
from jax.experimental.pallas import tpu as pltpu


# ---------------------------------------------------------------------------
# Helpers
# ---------------------------------------------------------------------------

def _vmem_spec():
    return pl.BlockSpec(memory_space=pltpu.MemorySpace.VMEM)


def _layer_norm(x, w, b, eps=1e-5):
    # x: (R, D) f32; w, b: (1, D) f32
    mu = jnp.mean(x, axis=-1, keepdims=True)
    var = jnp.mean((x - mu) ** 2, axis=-1, keepdims=True)
    return (x - mu) * jax.lax.rsqrt(var + eps) * w + b


# ---------------------------------------------------------------------------
# Pallas kernels
# ---------------------------------------------------------------------------

def embed_kernel(x_ref, w_ref, b_ref, pos_ref, o_ref):
    # x: (B*S, F) f32, w: (F, D) bf16 (pre-transposed), b: (1, D) f32, pos: (B*S, D) f32
    y = jnp.dot(x_ref[...].astype(jnp.bfloat16), w_ref[...],
                preferred_element_type=jnp.float32)
    o_ref[...] = y + b_ref[...] + pos_ref[...]


def encoder_stack_kernel(x_ref, wqkv_ref, bqkv_ref, wo_ref, bo_ref,
                         ln1w_ref, ln1b_ref, ln2w_ref, ln2b_ref,
                         w1_ref, b1_ref, w2_ref, b2_ref, o_ref,
                         *, num_heads, seq_len):
    # Grid = (batch_blocks, num_layers); layer axis is innermost ("arbitrary").
    # o_ref holds the activation slab for this batch block, resident across layers.
    layer = pl.program_id(1)

    @pl.when(layer == 0)
    def _init():
        o_ref[...] = x_ref[...]

    x = o_ref[...]                              # (R, D) f32
    R, D = x.shape
    Bb = R // seq_len
    H = num_heads
    hd = D // H
    scale = 1.0 / math.sqrt(hd)

    xb = x.astype(jnp.bfloat16)

    # ---- self-attention: fused QKV projection (single MXU push) ----
    qkv = jnp.dot(xb, wqkv_ref[...], preferred_element_type=jnp.float32) + bqkv_ref[...]
    qkv = qkv.astype(jnp.bfloat16)              # (R, 3D)

    def split_heads(t):                         # (R, D) -> (Bb*H, S, hd)
        return (t.reshape(Bb, seq_len, H, hd)
                 .transpose(0, 2, 1, 3)
                 .reshape(Bb * H, seq_len, hd))

    q = split_heads(qkv[:, 0 * D:1 * D])
    k = split_heads(qkv[:, 1 * D:2 * D])
    v = split_heads(qkv[:, 2 * D:3 * D])

    # batched attention over folded (batch*heads) axis
    s = jnp.einsum('bqd,bkd->bqk', q, k, preferred_element_type=jnp.float32) * scale
    m = jnp.max(s, axis=-1, keepdims=True)
    e = jnp.exp(s - m)
    p = e * pl.reciprocal(jnp.sum(e, axis=-1, keepdims=True), approx=True)
    ctx = jnp.einsum('bqk,bkd->bqd', p.astype(jnp.bfloat16), v,
                     preferred_element_type=jnp.float32)
    attn = (ctx.reshape(Bb, H, seq_len, hd)
               .transpose(0, 2, 1, 3)
               .reshape(R, D))

    attn = jnp.dot(attn.astype(jnp.bfloat16), wo_ref[...],
                   preferred_element_type=jnp.float32) + bo_ref[...]

    # residual + LayerNorm 1 (post-norm)
    y = _layer_norm(x + attn, ln1w_ref[...], ln1b_ref[...])

    # ---- feed-forward (ReLU) ----
    h1 = jnp.dot(y.astype(jnp.bfloat16), w1_ref[...],
                 preferred_element_type=jnp.float32) + b1_ref[...]
    h1 = jnp.maximum(h1, 0.0)
    ff = jnp.dot(h1.astype(jnp.bfloat16), w2_ref[...],
                 preferred_element_type=jnp.float32) + b2_ref[...]

    # residual + LayerNorm 2
    o_ref[...] = _layer_norm(y + ff, ln2w_ref[...], ln2b_ref[...])


def pool_output_kernel(x_ref, w_ref, b_ref, o_ref):
    # x: (B, S, D) f32, w: (D, O) bf16 (pre-transposed), b: (1, O) f32 -> o: (B, O) f32
    pooled = jnp.mean(x_ref[...], axis=1)
    o_ref[...] = jnp.dot(pooled.astype(jnp.bfloat16), w_ref[...],
                         preferred_element_type=jnp.float32) + b_ref[...]


# ---------------------------------------------------------------------------
# Wrappers (pallas_call plumbing; all host-side layout work lives here)
# ---------------------------------------------------------------------------

def embed_pallas(x2d, w_t_bf16, b_row, pos2d):
    R = x2d.shape[0]
    D = w_t_bf16.shape[1]
    return pl.pallas_call(
        embed_kernel,
        out_shape=jax.ShapeDtypeStruct((R, D), jnp.float32),
        in_specs=[_vmem_spec()] * 4,
        out_specs=_vmem_spec(),
    )(x2d, w_t_bf16, b_row, pos2d)


def encoder_stack_pallas(x2d, stacked, *, num_heads, seq_len, batch_block):
    R, D = x2d.shape
    B = R // seq_len
    L = stacked['wqkv'].shape[0]
    dff = stacked['w1'].shape[-1]

    assert B % batch_block == 0, "batch_block must divide batch"
    nb = B // batch_block
    rows = batch_block * seq_len              # rows per grid block (whole batch elements)

    def xmap(b, l):
        return (b, 0)

    def wmap(b, l):
        return (l, 0, 0)

    in_specs = [
        pl.BlockSpec((rows, D), xmap),                  # x (read at layer 0 only)
        pl.BlockSpec((None, D, 3 * D), wmap),           # wqkv
        pl.BlockSpec((None, 1, 3 * D), wmap),           # bqkv
        pl.BlockSpec((None, D, D), wmap),               # wo
        pl.BlockSpec((None, 1, D), wmap),               # bo
        pl.BlockSpec((None, 1, D), wmap),               # ln1w
        pl.BlockSpec((None, 1, D), wmap),               # ln1b
        pl.BlockSpec((None, 1, D), wmap),               # ln2w
        pl.BlockSpec((None, 1, D), wmap),               # ln2b
        pl.BlockSpec((None, D, dff), wmap),             # w1
        pl.BlockSpec((None, 1, dff), wmap),             # b1
        pl.BlockSpec((None, dff, D), wmap),             # w2
        pl.BlockSpec((None, 1, D), wmap),               # b2
    ]
    out_spec = pl.BlockSpec((rows, D), xmap)            # resident across the layer axis

    # Advisory cost estimate for XLA scheduling.
    flops = 2 * R * D * (3 * D + 2 * seq_len + D + 2 * dff) * L
    transcendentals = L * B * num_heads * seq_len * seq_len
    w_bytes = L * nb * 2 * (3 * D * D + D * D + 2 * D * dff)   # bf16 weights, per batch block
    act_bytes = 2 * R * D * 4
    cost = pl.CostEstimate(flops=int(flops),
                           transcendentals=int(transcendentals),
                           bytes_accessed=int(w_bytes + act_bytes))

    kern = functools.partial(encoder_stack_kernel, num_heads=num_heads, seq_len=seq_len)
    return pl.pallas_call(
        kern,
        out_shape=jax.ShapeDtypeStruct((R, D), jnp.float32),
        grid=(nb, L),
        in_specs=in_specs,
        out_specs=out_spec,
        compiler_params=pltpu.CompilerParams(
            dimension_semantics=("parallel", "arbitrary")),
        cost_estimate=cost,
    )(x2d, stacked['wqkv'], stacked['bqkv'], stacked['wo'], stacked['bo'],
      stacked['ln1w'], stacked['ln1b'], stacked['ln2w'], stacked['ln2b'],
      stacked['w1'], stacked['b1'], stacked['w2'], stacked['b2'])


def pool_output_pallas(x2d, w_t_bf16, b_row, batch, seq_len):
    D = x2d.shape[1]
    O = w_t_bf16.shape[1]
    x3 = x2d.reshape(batch, seq_len, D)   # host/XLA-side reshape (layout plumbing)
    return pl.pallas_call(
        pool_output_kernel,
        out_shape=jax.ShapeDtypeStruct((batch, O), jnp.float32),
        in_specs=[_vmem_spec()] * 3,
        out_specs=_vmem_spec(),
    )(x3, w_t_bf16, b_row)


def prepare_encoder_stack(layers):
    """Stack per-layer PyTorch-style params along a leading layer axis;
    pre-transpose weights to (in, out) and cast to bf16 on the host."""
    def stk(fn):
        return jnp.stack([fn(lp) for lp in layers], axis=0)

    return {
        'wqkv': stk(lambda p: p['in_proj_w'].T.astype(jnp.bfloat16)),    # (L, D, 3D)
        'bqkv': stk(lambda p: p['in_proj_b'].reshape(1, -1)),            # (L, 1, 3D)
        'wo':   stk(lambda p: p['out_proj_w'].T.astype(jnp.bfloat16)),   # (L, D, D)
        'bo':   stk(lambda p: p['out_proj_b'].reshape(1, -1)),           # (L, 1, D)
        'ln1w': stk(lambda p: p['ln1_w'].reshape(1, -1)),
        'ln1b': stk(lambda p: p['ln1_b'].reshape(1, -1)),
        'ln2w': stk(lambda p: p['ln2_w'].reshape(1, -1)),
        'ln2b': stk(lambda p: p['ln2_b'].reshape(1, -1)),
        'w1':   stk(lambda p: p['ffn_w1'].T.astype(jnp.bfloat16)),       # (L, D, dff)
        'b1':   stk(lambda p: p['ffn_b1'].reshape(1, -1)),               # (L, 1, dff)
        'w2':   stk(lambda p: p['ffn_w2'].T.astype(jnp.bfloat16)),       # (L, dff, D)
        'b2':   stk(lambda p: p['ffn_b2'].reshape(1, -1)),               # (L, 1, D)
    }


def transformer_forward(src, params, num_heads, batch_block=1):
    B, S, F = src.shape
    D = params['embed_w'].shape[0]

    # lane-dense 2-D activation slab (B*S, D); all reshapes happen at the JAX level
    x2d = src.reshape(B * S, F)
    pos2d = jnp.broadcast_to(params['pos'], (B, S, D)).reshape(B * S, D)

    x = embed_pallas(x2d,
                     params['embed_w'].T.astype(jnp.bfloat16),
                     params['embed_b'].reshape(1, -1),
                     pos2d)

    stacked = prepare_encoder_stack(params['layers'])
    x = encoder_stack_pallas(x, stacked, num_heads=num_heads, seq_len=S,
                             batch_block=batch_block)

    return pool_output_pallas(x,
                              params['out_w'].T.astype(jnp.bfloat16),
                              params['out_b'].reshape(1, -1),
                              B, S)


# ---------------------------------------------------------------------------
# Deterministic parameter construction (PyTorch-style (out, in) weights)
# ---------------------------------------------------------------------------

def init_params(key, input_features, model_dim, num_heads, num_layers,
                seq_length, output_dim, dim_feedforward):
    keys = iter(jax.random.split(key, 6 * num_layers + 8))

    def nrm(shape, scale=0.02):
        return (scale * jax.random.normal(next(keys), shape)).astype(jnp.float32)

    params = {
        'embed_w': nrm((model_dim, input_features)),
        'embed_b': nrm((model_dim,)),
        # nn.Parameter(torch.zeros(1, seq_length, model_dim))
        'pos': jnp.zeros((1, seq_length, model_dim), jnp.float32),
        'out_w': nrm((output_dim, model_dim)),
        'out_b': nrm((output_dim,)),
        'layers': [],
    }
    for _ in range(num_layers):
        params['layers'].append({
            'in_proj_w': nrm((3 * model_dim, model_dim)),
            'in_proj_b': nrm((3 * model_dim,)),
            'out_proj_w': nrm((model_dim, model_dim)),
            'out_proj_b': nrm((model_dim,)),
            'ln1_w': jnp.ones((model_dim,), jnp.float32),
            'ln1_b': jnp.zeros((model_dim,), jnp.float32),
            'ln2_w': jnp.ones((model_dim,), jnp.float32),
            'ln2_b': jnp.zeros((model_dim,), jnp.float32),
            'ffn_w1': nrm((dim_feedforward, model_dim)),
            'ffn_b1': nrm((dim_feedforward,)),
            'ffn_w2': nrm((model_dim, dim_feedforward)),
            'ffn_b2': nrm((model_dim,)),
        })
    return params


# ---------------------------------------------------------------------------
# Main
# ---------------------------------------------------------------------------

if __name__ == "__main__":
    BATCH = 2
    SEQ_LENGTH = 8
    INPUT_FEATURES = 16
    MODEL_DIM = 32
    NUM_HEADS = 4
    NUM_LAYERS = 2
    OUTPUT_DIM = 75
    DIM_FEEDFORWARD = 2048  # nn.TransformerEncoderLayer default

    key = jax.random.PRNGKey(0)
    k_param, k_data = jax.random.split(key)

    params = init_params(k_param, INPUT_FEATURES, MODEL_DIM, NUM_HEADS,
                         NUM_LAYERS, SEQ_LENGTH, OUTPUT_DIM, DIM_FEEDFORWARD)

    src = jax.random.normal(k_data, (BATCH, SEQ_LENGTH, INPUT_FEATURES),
                            dtype=jnp.float32)

    # batch_block=1 -> grid=(2, num_layers): parallel batch axis (v7x megacore) and
    # per-block FFN intermediate of only (S, dff) rows in VMEM.
    out = transformer_forward(src, params, NUM_HEADS, batch_block=1)
    out = jax.block_until_ready(out)

    assert out.shape == (BATCH, OUTPUT_DIM), out.shape
    assert out.dtype == jnp.float32
    assert bool(jnp.all(jnp.isfinite(out)))
    print("KERNEL_OK")
</pallas_src>

<mosaic_0001>
module attributes {stable_mosaic.version = 11 : i64} {
  func.func @embed_kernel(%arg0: memref<16x16xf32, #tpu.memory_space<vmem>>, %arg1: memref<16x32xbf16, #tpu.memory_space<vmem>>, %arg2: memref<1x32xf32, #tpu.memory_space<vmem>>, %arg3: memref<16x32xf32, #tpu.memory_space<vmem>>, %arg4: memref<16x32xf32, #tpu.memory_space<vmem>>) attributes {dimension_semantics = [], scalar_prefetch = 0 : i64, scratch_operands = 0 : i64, tpu.core_type = #tpu.core_type<tc>} {
    %c0 = arith.constant 0 : index
    %c0_0 = arith.constant 0 : index
    %0 = vector.load %arg0[%c0, %c0_0] : memref<16x16xf32, #tpu.memory_space<vmem>>, vector<16x16xf32>
    %1 = arith.truncf %0 : vector<16x16xf32> to vector<16x16xbf16>
    %c0_1 = arith.constant 0 : index
    %c0_2 = arith.constant 0 : index
    %2 = vector.load %arg1[%c0_1, %c0_2] : memref<16x32xbf16, #tpu.memory_space<vmem>>, vector<16x32xbf16>
    %cst = arith.constant dense<0.000000e+00> : vector<16x32xf32>
    %3 = tpu.matmul %1, %2, %cst {dimension_numbers = #tpu.dot_dimension_numbers<[1], [0], [0], [1], [0, 0, 1, 1], [], []>} : vector<16x16xbf16>, vector<16x32xbf16>, vector<16x32xf32> -> vector<16x32xf32>
    %c0_3 = arith.constant 0 : index
    %c0_4 = arith.constant 0 : index
    %4 = vector.load %arg2[%c0_3, %c0_4] : memref<1x32xf32, #tpu.memory_space<vmem>>, vector<1x32xf32>
    %5 = vector.broadcast %4 : vector<1x32xf32> to vector<16x32xf32>
    %6 = arith.addf %3, %5 : vector<16x32xf32>
    %c0_5 = arith.constant 0 : index
    %c0_6 = arith.constant 0 : index
    %7 = vector.load %arg3[%c0_5, %c0_6] : memref<16x32xf32, #tpu.memory_space<vmem>>, vector<16x32xf32>
    %8 = arith.addf %6, %7 : vector<16x32xf32>
    %c0_7 = arith.constant 0 : index
    %c0_8 = arith.constant 0 : index
    %9 = vector.load %arg4[%c0_7, %c0_8] : memref<16x32xf32, #tpu.memory_space<vmem>>, vector<16x32xf32>
    tpu.vector_store %arg4[%c0_7, %c0_8], %8 {strides = array<i32>} : memref<16x32xf32, #tpu.memory_space<vmem>>, vector<16x32xf32>,
    return
  }
}

</mosaic_0001>

<llo_original>
// kernel: tpu_custom_call.1
$region0: #{tpu_custom_call.1}
  #allocation0 [shape = 'u32[]', space=smem, size = 0x4, offset = 0x4, fixed_abs, tag = 'smem constant byte address 0x4 - core index']
  #allocation1 [shape = 'u32[144,128]{1,0:T(1,128)}', space=vmem, size = 0x12000, scoped, tag = 'internal scratch']
  %s0 = inlined_call_operand.hbm [shape: f32[16,16], index: 0, kind: input, shape index: {}]
  %s1 = inlined_call_operand.hbm [shape: bf16[16,32], index: 1, kind: input, shape index: {}]
  %s2 = inlined_call_operand.vmem [shape: f32[1,32], index: 2, kind: input, shape index: {}]
  %s3 = inlined_call_operand.hbm [shape: f32[16,32], index: 3, kind: input, shape index: {}]
  %s4 = inlined_call_operand.hbm [shape: f32[16,32], index: 4, kind: output, shape index: {}]
  %s5 = sld [smem:[#allocation0]]
  $region38: #{tpu_custom_call.1} parent=0
    _
  %s7 = ssub.s32 1, %s5
  %s8 = scalar_select 0, %s7, %s5
  $region1: #{tpu_custom_call.1} parent=0
    #allocation2 [shape = 'u8[8192]{0}', space=vmem, size = 0x2000, scoped, tag = 'input window, operand 0, single buffered']
    #allocation3 [shape = 's32[1]{0}', space=sflag, size = 0x4, scoped, tag = 'scoped memory for tpu_custom_call.1']
    #allocation4 [shape = 's32[1]{0}', space=sflag, size = 0x4, scoped, tag = 'scoped memory for tpu_custom_call.1']
    #allocation5 [shape = 'u8[4096]{0}', space=vmem, size = 0x1000, scoped, tag = 'input window, operand 1, single buffered']
    #allocation6 [shape = 's32[1]{0}', space=sflag, size = 0x4, scoped, tag = 'scoped memory for tpu_custom_call.1']
    #allocation7 [shape = 'u8[8192]{0}', space=vmem, size = 0x2000, scoped, tag = 'input window, operand 3, single buffered']
    #allocation8 [shape = 'u8[8192]{0}', space=vmem, size = 0x2000, scoped, tag = 'output window, operand 0, single buffered']
    %9 = vsyncpa [#allocation3], 0
    %10 = vsyncpa [#allocation6], 0
    %11 = vsyncpa [#allocation4], 0
    // Predicated region
    $region2: #{tpu_custom_call.1} parent=1 // pred_check
      _
    $region3: #{tpu_custom_call.1} parent=1 // pred_check_branch
      %13 = sbr.rel (0) target = $region5
    $region4: #{tpu_custom_call.1} parent=1 // pred_region
      %s15 = ssub.s32 256, 256
      %16 = vsyncadd [#allocation3], %s15
      %s17 = sshll.u32 [#allocation2], 4
      %s18 = int_to_ptr.vmem [resolvable:$true] %s17
      %23 = dma.hbm_to_vmem [thread:$0]  %s0, 256, %s18, [#allocation3], 128, 128, 8
    $region5: #{tpu_custom_call.1} parent=1 // pred_fallthru
      _
    // Predicated region
    $region6: #{tpu_custom_call.1} parent=1 // pred_check
      _
    $region7: #{tpu_custom_call.1} parent=1 // pred_check_branch
      %25 = sbr.rel (0) target = $region9
    $region8: #{tpu_custom_call.1} parent=1 // pred_region
      %s27 = ssub.s32 128, 128
      %28 = vsyncadd [#allocation6], %s27
      %s29 = sshll.u32 [#allocation5], 4
      %s30 = int_to_ptr.vmem [resolvable:$true] %s29
      %35 = dma.hbm_to_vmem [thread:$0]  %s1, 128, %s30, [#allocation6], 64, 64, 4
    $region9: #{tpu_custom_call.1} parent=1 // pred_fallthru
      _
    // Predicated region
    $region10: #{tpu_custom_call.1} parent=1 // pred_check
      _
    $region11: #{tpu_custom_call.1} parent=1 // pred_check_branch
      %37 = sbr.rel (0) target = $region13
    $region12: #{tpu_custom_call.1} parent=1 // pred_region
      _
    $region13: #{tpu_custom_call.1} parent=1 // pred_fallthru
      _
    // Predicated region
    $region14: #{tpu_custom_call.1} parent=1 // pred_check
      _
    $region15: #{tpu_custom_call.1} parent=1 // pred_check_branch
      %39 = sbr.rel (0) target = $region17
    $region16: #{tpu_custom_call.1} parent=1 // pred_region
      %s41 = ssub.s32 256, 256
      %42 = vsyncadd [#allocation6], %s41
      %s43 = sshll.u32 [#allocation7], 4
      %s44 = int_to_ptr.vmem [resolvable:$true] %s43
      %49 = dma.hbm_to_vmem [thread:$0]  %s3, 256, %s44, [#allocation6], 128, 128, 8
    $region17: #{tpu_custom_call.1} parent=1 // pred_fallthru
      _
    // Predicated region
    $region18: #{tpu_custom_call.1} parent=1 // pred_check
      _
    $region19: #{tpu_custom_call.1} parent=1 // pred_check_branch
      %51 = sbr.rel (0) target = $region21
    $region20: #{tpu_custom_call.1} parent=1 // pred_region
      %52 = dma.done [#allocation3], 256
    $region21: #{tpu_custom_call.1} parent=1 // pred_fallthru
      _
    // Predicated region
    $region22: #{tpu_custom_call.1} parent=1 // pred_check
      _
    $region23: #{tpu_custom_call.1} parent=1 // pred_check_branch
      %54 = sbr.rel (0) target = $region25
    $region24: #{tpu_custom_call.1} parent=1 // pred_region
      %55 = dma.done [#allocation6], 128
    $region25: #{tpu_custom_call.1} parent=1 // pred_fallthru
      _
    // Predicated region
    $region26: #{tpu_custom_call.1} parent=1 // pred_check
      _
    $region27: #{tpu_custom_call.1} parent=1 // pred_check_branch
      %57 = sbr.rel (0) target = $region29
    $region28: #{tpu_custom_call.1} parent=1 // pred_region
      %58 = dma.done [#allocation6], 256
    $region29: #{tpu_custom_call.1} parent=1 // pred_fallthru
      _
    %v60 = vld [vmem:[#allocation2] sm:$0xff]
    %v61 = vld [vmem:[#allocation2 + $0x8] sm:$0xff]
    %v62 = vpack.c.bf16 %v61, %v60
    %v63 = vld [vmem:[#allocation5] sm:$0xf]
    %v64 = vld [vmem:[#allocation5 + $0x4] sm:$0xf]
    %v65 = vld [vmem:[%s2] sm:$0x1]
    %v67 = vlaneseq
    %v68 = vshrl.u32 %v67, 7
    %v69 = vsub.s32 0, %v68
    %v70 = vrot.slane %v65, %v69
    %v74 = vunpack.c.l.b16 %v63
    %v75 = vunpack.c.l.b16 %v64
    %v76 = vpack.c.b16 %v75, %v74
    %vm78 = vcmask 130048
    %v80 = vsel %vm78, %v62, 0
    %82 = vmatprep.subr.bf16.mxu0 0
    %83 = vmatpush1.bf16.msra.mxu0 0
    %84 = vmatprep.subr.bf16.mxu0 0
    %85 = vmatpush1.bf16.msra.mxu0 0
    %86 = vmatprep.subr.bf16.mxu0 0
    %87 = vmatpush1.bf16.msra.mxu0 0
    %88 = vmatprep.subr.bf16.mxu0 0
    %89 = vmatpush1.bf16.msra.mxu0 0
    %90 = vmatprep.subr.bf16.mxu0 0
    %91 = vmatpush1.bf16.msra.mxu0 0
    %92 = vmatprep.subr.bf16.mxu0 0
    %93 = vmatpush1.bf16.msra.mxu0 0
    %94 = vmatprep.subr.bf16.mxu0 0
    %95 = vmatpush1.bf16.msra.mxu0 0
    %96 = vmatprep.subr.bf16.mxu0 0
    %97 = vmatpush1.bf16.msra.mxu0 %v76
    %98 = vmatprep.subr.bf16.mxu0 0
    %99 = vmatpush2.bf16.msra.mxu0 0
    %100 = vmatprep.subr.bf16.mxu0 0
    %101 = vmatpush2.bf16.msra.mxu0 0
    %102 = vmatprep.subr.bf16.mxu0 0
    %103 = vmatpush2.bf16.msra.mxu0 0
    %104 = vmatprep.subr.bf16.mxu0 0
    %105 = vmatpush2.bf16.msra.mxu0 0
    %106 = vmatprep.subr.bf16.mxu0 0
    %107 = vmatpush2.bf16.msra.mxu0 0
    %108 = vmatprep.subr.bf16.mxu0 0
    %109 = vmatpush2.bf16.msra.mxu0 0
    %110 = vmatprep.subr.bf16.mxu0 0
    %111 = vmatpush2.bf16.msra.mxu0 0
    %112 = vmatprep.subr.bf16.mxu0 0
    %113 = vmatpush2.bf16.msra.mxu0 0
    %114 = vmatprep.mubr.bf16.mxu0 0
    %115 = vmatmul.mubr.bf16.gmra.mxu0 %v80
    %v116 = vpop.f32.mrf.mxu0
    %v117 = vadd.f32 %v70, %v116
    %v118 = vpop.f32.mrf.mxu0
    %v119 = vpop.f32.mrf.mxu0
    %v120 = vadd.f32 %v70, %v119
    %v121 = vpop.f32.mrf.mxu0
    %122 = vdwg.mxu0
    %v123 = vld [vmem:[#allocation7] sm:$0xff]
    %v124 = vld [vmem:[#allocation7 + $0x8] sm:$0xff]
    %v125 = vadd.f32 %v117, %v123
    %v126 = vadd.f32 %v120, %v124
    %vm127 = vcmask 261120
    %128 = vst.msk [vmem:[#allocation8] sm:$0xff] %vm127, %v125
    %129 = vst.msk [vmem:[#allocation8 + $0x8] sm:$0xff] %vm127, %v126
    // Predicated region
    $region30: #{tpu_custom_call.1} parent=1 // pred_check
      _
    $region31: #{tpu_custom_call.1} parent=1 // pred_check_branch
      %131 = sbr.rel (0) target = $region33
    $region32: #{tpu_custom_call.1} parent=1 // pred_region
      %s133 = ssub.s32 256, 256
      %134 = vsyncadd [#allocation4], %s133
      %s135 = sshll.u32 [#allocation8], 4
      %s136 = int_to_ptr.vmem [resolvable:$true] %s135
      %141 = dma.vmem_to_hbm [thread:$0]  %s136, 256, %s4, [#allocation4], 128, 128, 8
    $region33: #{tpu_custom_call.1} parent=1 // pred_fallthru
      _
    // Predicated region
    $region34: #{tpu_custom_call.1} parent=1 // pred_check
      _
    $region35: #{tpu_custom_call.1} parent=1 // pred_check_branch
      %143 = sbr.rel (0) target = $region37
    $region36: #{tpu_custom_call.1} parent=1 // pred_region
      %144 = dma.done [#allocation4], 256
    $region37: #{tpu_custom_call.1} parent=1 // pred_fallthru
      _
    %145 = vsyncpa [#allocation3], 1
    %146 = vsyncpa [#allocation6], 1
    %147 = vsyncpa [#allocation4], 1

</llo_original>
